<compile_context>
chip_gen: v7x
topology: tpu7x:2x2x1
jax: 0.10.0
libtpu: 0.0.40
codegen_flags: <defaults>
</compile_context>

<pallas_src>
import math

import jax
import jax.numpy as jnp
from jax.experimental import pallas as pl
from jax.experimental.pallas import tpu as pltpu

# ----------------------------- configuration --------------------------------
B = 2          # batch
S = 8          # sequence length
Q_DIM = 32     # q_dim == kv_dim == qk_channels == v_channels (module defaults)
NUM_HEADS = 2
QK_CHANNELS = Q_DIM
V_CHANNELS = QK_CHANNELS
DH_QK = QK_CHANNELS // NUM_HEADS
DH_V = V_CHANNELS // NUM_HEADS
OUT_CHANNELS = V_CHANNELS   # self-attention path: output_channels = v_channels
LN_EPS = 1e-5


# ------------------------------- Pallas kernel -------------------------------
def _make_kernel(batch, seq, num_heads, dh_qk, dh_v, eps):
    scale = 1.0 / math.sqrt(dh_qk)
    qk = num_heads * dh_qk

    def kernel(x_ref, g1_ref, b1_ref, wqkv_ref, bqkv_ref, wo_ref, bo_ref,
               out_ref, ctx_ref):
        x = x_ref[...]                                   # (B*S, D)

        # LayerNorm1 over the feature axis (layernorm2 is nn.Identity here).
        mu = jnp.mean(x, axis=-1, keepdims=True)
        var = jnp.mean((x - mu) * (x - mu), axis=-1, keepdims=True)
        h = (x - mu) * jax.lax.rsqrt(var + eps)
        h = h * g1_ref[...] + b1_ref[...]                # (B*S, D)

        # Fused Q/K/V projection: one MXU matmul, 3*QK-wide output lanes.
        qkv = jnp.dot(h, wqkv_ref[...],
                      preferred_element_type=jnp.float32) + bqkv_ref[...]
        q = qkv[:, :qk]                                  # (B*S, QK)
        k = qkv[:, qk:2 * qk]                            # (B*S, QK)
        v = qkv[:, 2 * qk:]                              # (B*S, V)

        # Per-head scaled-dot-product attention, batched over the batch axis.
        # (Static unroll over the 2 heads; each head is one batched contraction.)
        for hd in range(num_heads):
            qh = q[:, hd * dh_qk:(hd + 1) * dh_qk].reshape(batch, seq, dh_qk)
            kh = k[:, hd * dh_qk:(hd + 1) * dh_qk].reshape(batch, seq, dh_qk)
            vh = v[:, hd * dh_v:(hd + 1) * dh_v].reshape(batch, seq, dh_v)

            # Contract on the last axis of both q and k -> no explicit kh.T.
            s = jnp.einsum("bqd,bkd->bqk", qh, kh,
                           preferred_element_type=jnp.float32) * scale
            s = s - jnp.max(s, axis=-1, keepdims=True)
            p = jnp.exp(s)
            p = p * pl.reciprocal(jnp.sum(p, axis=-1, keepdims=True), approx=True)
            # dropout: eval mode -> identity. head_mask / attention_mask: None.
            c = jnp.einsum("bqk,bkd->bqd", p, vh,
                           preferred_element_type=jnp.float32)
            # Write this head's context into the slab at a static lane offset.
            ctx_ref[:, hd * dh_v:(hd + 1) * dh_v] = c.reshape(batch * seq, dh_v)

        # Output dense + query residual.
        out = jnp.dot(ctx_ref[...], wo_ref[...],
                      preferred_element_type=jnp.float32) + bo_ref[...]
        out_ref[...] = (out + x).astype(out_ref.dtype)

    return kernel


def perceiver_attention(x, params):
    """x: (B, S, D) float32.  params: dict of weights (see init below)."""
    B_, S_, D_ = x.shape
    x2 = x.reshape(B_ * S_, D_)                          # collapse batch: one call

    # Pack Q/K/V weights & biases (wrapper-side, cheap XLA concat).
    wqkv = jnp.concatenate([params["wq"], params["wk"], params["wv"]], axis=1)
    bqkv = jnp.concatenate([params["bq"], params["bk"], params["bv"]], axis=1)

    kernel = _make_kernel(B_, S_, NUM_HEADS, DH_QK, DH_V, LN_EPS)

    out2 = pl.pallas_call(
        kernel,
        out_shape=jax.ShapeDtypeStruct((B_ * S_, OUT_CHANNELS), x.dtype),
        scratch_shapes=[pltpu.VMEM((B_ * S_, V_CHANNELS), jnp.float32)],
    )(x2, params["g1"], params["b1"], wqkv, bqkv, params["wo"], params["bo"])

    return out2.reshape(B_, S_, OUT_CHANNELS)


# ----------------------------- pure-JAX reference ----------------------------
def reference(x, p):
    mu = jnp.mean(x, axis=-1, keepdims=True)
    var = jnp.mean((x - mu) ** 2, axis=-1, keepdims=True)
    h = (x - mu) / jnp.sqrt(var + LN_EPS) * p["g1"][0] + p["b1"][0]

    q = h @ p["wq"] + p["bq"][0]
    k = h @ p["wk"] + p["bk"][0]
    v = h @ p["wv"] + p["bv"][0]

    def split(t, dh):
        Bb, Ss, _ = t.shape
        return t.reshape(Bb, Ss, NUM_HEADS, dh).transpose(0, 2, 1, 3)

    qh, kh, vh = split(q, DH_QK), split(k, DH_QK), split(v, DH_V)
    scores = jnp.einsum("bhqd,bhkd->bhqk", qh, kh) / math.sqrt(DH_QK)
    probs = jax.nn.softmax(scores, axis=-1)
    ctx = jnp.einsum("bhqk,bhkd->bhqd", probs, vh)
    ctx = ctx.transpose(0, 2, 1, 3).reshape(x.shape[0], x.shape[1], V_CHANNELS)
    out = ctx @ p["wo"] + p["bo"][0]
    return out + x


# ---------------------------------- main --------------------------------------
if __name__ == "__main__":
    key = jax.random.PRNGKey(0)
    ks = jax.random.split(key, 12)

    def lin_init(k, fan_in, shape):
        bound = 1.0 / math.sqrt(fan_in)
        return jax.random.uniform(k, shape, jnp.float32, -bound, bound)

    params = {
        # LayerNorm1 (PyTorch default init gamma=1, beta=0; perturbed slightly
        # but deterministically to exercise the affine path)
        "g1": jnp.ones((1, Q_DIM), jnp.float32)
              + 0.01 * jax.random.normal(ks[0], (1, Q_DIM), jnp.float32),
        "b1": 0.01 * jax.random.normal(ks[1], (1, Q_DIM), jnp.float32),
        # Linear layers, stored as (in, out)
        "wq": lin_init(ks[2], Q_DIM, (Q_DIM, QK_CHANNELS)),
        "bq": lin_init(ks[3], Q_DIM, (1, QK_CHANNELS)),
        "wk": lin_init(ks[4], Q_DIM, (Q_DIM, QK_CHANNELS)),
        "bk": lin_init(ks[5], Q_DIM, (1, QK_CHANNELS)),
        "wv": lin_init(ks[6], Q_DIM, (Q_DIM, V_CHANNELS)),
        "bv": lin_init(ks[7], Q_DIM, (1, V_CHANNELS)),
        "wo": lin_init(ks[8], V_CHANNELS, (V_CHANNELS, OUT_CHANNELS)),
        "bo": lin_init(ks[9], V_CHANNELS, (1, OUT_CHANNELS)),
    }

    x = jax.random.normal(ks[10], (B, S, Q_DIM), jnp.float32)

    out = perceiver_attention(x, params)
    out = jax.block_until_ready(out)

    ref = reference(x, params)
    assert out.shape == (B, S, OUT_CHANNELS)
    # Tolerance accounts for the approx (EUP) reciprocal in the softmax.
    assert jnp.allclose(out, ref, atol=5e-3, rtol=5e-3), \
        f"max err {jnp.max(jnp.abs(out - ref))}"

    print("KERNEL_OK")
</pallas_src>

<mosaic_0001>
module attributes {stable_mosaic.version = 11 : i64} {
  func.func @kernel(%arg0: memref<16x32xf32, #tpu.memory_space<vmem>>, %arg1: memref<1x32xf32, #tpu.memory_space<vmem>>, %arg2: memref<1x32xf32, #tpu.memory_space<vmem>>, %arg3: memref<32x96xf32, #tpu.memory_space<vmem>>, %arg4: memref<1x96xf32, #tpu.memory_space<vmem>>, %arg5: memref<32x32xf32, #tpu.memory_space<vmem>>, %arg6: memref<1x32xf32, #tpu.memory_space<vmem>>, %arg7: memref<16x32xf32, #tpu.memory_space<vmem>>, %arg8: memref<16x32xf32, #tpu.memory_space<vmem>>) attributes {dimension_semantics = [], scalar_prefetch = 0 : i64, scratch_operands = 1 : i64, tpu.core_type = #tpu.core_type<tc>} {
    %c0 = arith.constant 0 : index
    %c0_0 = arith.constant 0 : index
    %0 = vector.load %arg0[%c0, %c0_0] : memref<16x32xf32, #tpu.memory_space<vmem>>, vector<16x32xf32>
    %cst = arith.constant dense<0.000000e+00> : vector<16xf32>
    %1 = vector.multi_reduction <add>, %0, %cst [1] : vector<16x32xf32> to vector<16xf32>
    %2 = vector.shape_cast %1 : vector<16xf32> to vector<16x1xf32>
    %cst_1 = arith.constant 3.200000e+01 : f32
    %3 = vector.broadcast %cst_1 : f32 to vector<16x1xf32>
    %4 = arith.divf %2, %3 : vector<16x1xf32>
    %5 = vector.broadcast %4 : vector<16x1xf32> to vector<16x32xf32>
    %6 = arith.subf %0, %5 : vector<16x32xf32>
    %7 = vector.broadcast %4 : vector<16x1xf32> to vector<16x32xf32>
    %8 = arith.subf %0, %7 : vector<16x32xf32>
    %9 = arith.mulf %6, %8 : vector<16x32xf32>
    %cst_2 = arith.constant dense<0.000000e+00> : vector<16xf32>
    %10 = vector.multi_reduction <add>, %9, %cst_2 [1] : vector<16x32xf32> to vector<16xf32>
    %11 = vector.shape_cast %10 : vector<16xf32> to vector<16x1xf32>
    %cst_3 = arith.constant 3.200000e+01 : f32
    %12 = vector.broadcast %cst_3 : f32 to vector<16x1xf32>
    %13 = arith.divf %11, %12 : vector<16x1xf32>
    %14 = vector.broadcast %4 : vector<16x1xf32> to vector<16x32xf32>
    %15 = arith.subf %0, %14 : vector<16x32xf32>
    %cst_4 = arith.constant 9.99999974E-6 : f32
    %16 = vector.broadcast %cst_4 : f32 to vector<16x1xf32>
    %17 = arith.addf %13, %16 : vector<16x1xf32>
    %18 = math.rsqrt %17 : vector<16x1xf32>
    %19 = vector.broadcast %18 : vector<16x1xf32> to vector<16x32xf32>
    %20 = arith.mulf %15, %19 : vector<16x32xf32>
    %c0_5 = arith.constant 0 : index
    %c0_6 = arith.constant 0 : index
    %21 = vector.load %arg1[%c0_5, %c0_6] : memref<1x32xf32, #tpu.memory_space<vmem>>, vector<1x32xf32>
    %22 = vector.broadcast %21 : vector<1x32xf32> to vector<16x32xf32>
    %23 = arith.mulf %20, %22 : vector<16x32xf32>
    %c0_7 = arith.constant 0 : index
    %c0_8 = arith.constant 0 : index
    %24 = vector.load %arg2[%c0_7, %c0_8] : memref<1x32xf32, #tpu.memory_space<vmem>>, vector<1x32xf32>
    %25 = vector.broadcast %24 : vector<1x32xf32> to vector<16x32xf32>
    %26 = arith.addf %23, %25 : vector<16x32xf32>
    %c0_9 = arith.constant 0 : index
    %c0_10 = arith.constant 0 : index
    %27 = vector.load %arg3[%c0_9, %c0_10] : memref<32x96xf32, #tpu.memory_space<vmem>>, vector<32x96xf32>
    %cst_11 = arith.constant dense<0.000000e+00> : vector<16x96xf32>
    %28 = tpu.matmul %26, %27, %cst_11 {dimension_numbers = #tpu.dot_dimension_numbers<[1], [0], [0], [1], [0, 0, 1, 1], [], []>} : vector<16x32xf32>, vector<32x96xf32>, vector<16x96xf32> -> vector<16x96xf32>
    %c0_12 = arith.constant 0 : index
    %c0_13 = arith.constant 0 : index
    %29 = vector.load %arg4[%c0_12, %c0_13] : memref<1x96xf32, #tpu.memory_space<vmem>>, vector<1x96xf32>
    %30 = vector.broadcast %29 : vector<1x96xf32> to vector<16x96xf32>
    %31 = arith.addf %28, %30 : vector<16x96xf32>
    %32 = vector.extract_strided_slice %31 {offsets = [0, 0], sizes = [16, 32], strides = [1, 1]} : vector<16x96xf32> to vector<16x32xf32>
    %33 = vector.extract_strided_slice %31 {offsets = [0, 32], sizes = [16, 32], strides = [1, 1]} : vector<16x96xf32> to vector<16x32xf32>
    %34 = vector.extract_strided_slice %31 {offsets = [0, 64], sizes = [16, 32], strides = [1, 1]} : vector<16x96xf32> to vector<16x32xf32>
    %35 = vector.extract_strided_slice %32 {offsets = [0, 0], sizes = [16, 16], strides = [1, 1]} : vector<16x32xf32> to vector<16x16xf32>
    %36 = vector.shape_cast %35 : vector<16x16xf32> to vector<2x8x16xf32>
    %37 = vector.extract_strided_slice %33 {offsets = [0, 0], sizes = [16, 16], strides = [1, 1]} : vector<16x32xf32> to vector<16x16xf32>
    %38 = vector.shape_cast %37 : vector<16x16xf32> to vector<2x8x16xf32>
    %39 = vector.extract_strided_slice %34 {offsets = [0, 0], sizes = [16, 16], strides = [1, 1]} : vector<16x32xf32> to vector<16x16xf32>
    %40 = vector.shape_cast %39 : vector<16x16xf32> to vector<2x8x16xf32>
    "tpu.trace_start"() <{level = 10 : i32, message = "bqd,bkd->bqk"}> : () -> ()
    %cst_14 = arith.constant dense<0.000000e+00> : vector<2x8x8xf32>
    %41 = tpu.matmul %36, %38, %cst_14 {dimension_numbers = #tpu.dot_dimension_numbers<[2], [2], [1], [1], [0, 0, 0, 1, 1, 1], [0], [0]>} : vector<2x8x16xf32>, vector<2x8x16xf32>, vector<2x8x8xf32> -> vector<2x8x8xf32>
    "tpu.trace_stop"() : () -> ()
    %cst_15 = arith.constant 2.500000e-01 : f32
    %42 = vector.broadcast %cst_15 : f32 to vector<2x8x8xf32>
    %43 = arith.mulf %41, %42 : vector<2x8x8xf32>
    %cst_16 = arith.constant dense<0xFF800000> : vector<2x8xf32>
    %44 = vector.multi_reduction <maximumf>, %43, %cst_16 [2] : vector<2x8x8xf32> to vector<2x8xf32>
    %45 = vector.shape_cast %44 : vector<2x8xf32> to vector<2x8x1xf32>
    %46 = vector.broadcast %45 : vector<2x8x1xf32> to vector<2x8x8xf32>
    %47 = arith.subf %43, %46 : vector<2x8x8xf32>
    %48 = math.exp %47 : vector<2x8x8xf32>
    %cst_17 = arith.constant dense<0.000000e+00> : vector<2x8xf32>
    %49 = vector.multi_reduction <add>, %48, %cst_17 [2] : vector<2x8x8xf32> to vector<2x8xf32>
    %50 = vector.shape_cast %49 : vector<2x8xf32> to vector<2x8x1xf32>
    %51 = tpu.reciprocal %50 {approx = true} : vector<2x8x1xf32> -> vector<2x8x1xf32>
    %52 = vector.broadcast %51 : vector<2x8x1xf32> to vector<2x8x8xf32>
    %53 = arith.mulf %48, %52 : vector<2x8x8xf32>
    "tpu.trace_start"() <{level = 10 : i32, message = "bqk,bkd->bqd"}> : () -> ()
    %cst_18 = arith.constant dense<0.000000e+00> : vector<2x8x16xf32>
    %54 = tpu.matmul %53, %40, %cst_18 {dimension_numbers = #tpu.dot_dimension_numbers<[2], [1], [1], [2], [0, 0, 0, 1, 1, 2], [0], [0]>} : vector<2x8x8xf32>, vector<2x8x16xf32>, vector<2x8x16xf32> -> vector<2x8x16xf32>
    "tpu.trace_stop"() : () -> ()
    %55 = vector.shape_cast %54 : vector<2x8x16xf32> to vector<16x16xf32>
    %c0_19 = arith.constant 0 : index
    %c0_20 = arith.constant 0 : index
    %56 = vector.load %arg8[%c0_19, %c0_20] : memref<16x32xf32, #tpu.memory_space<vmem>>, vector<16x16xf32>
    tpu.vector_store %arg8[%c0_19, %c0_20], %55 {strides = array<i32>} : memref<16x32xf32, #tpu.memory_space<vmem>>, vector<16x16xf32>,
    %57 = vector.extract_strided_slice %32 {offsets = [0, 16], sizes = [16, 16], strides = [1, 1]} : vector<16x32xf32> to vector<16x16xf32>
    %58 = vector.shape_cast %57 : vector<16x16xf32> to vector<2x8x16xf32>
    %59 = vector.extract_strided_slice %33 {offsets = [0, 16], sizes = [16, 16], strides = [1, 1]} : vector<16x32xf32> to vector<16x16xf32>
    %60 = vector.shape_cast %59 : vector<16x16xf32> to vector<2x8x16xf32>
    %61 = vector.extract_strided_slice %34 {offsets = [0, 16], sizes = [16, 16], strides = [1, 1]} : vector<16x32xf32> to vector<16x16xf32>
    %62 = vector.shape_cast %61 : vector<16x16xf32> to vector<2x8x16xf32>
    "tpu.trace_start"() <{level = 10 : i32, message = "bqd,bkd->bqk"}> : () -> ()
    %cst_21 = arith.constant dense<0.000000e+00> : vector<2x8x8xf32>
    %63 = tpu.matmul %58, %60, %cst_21 {dimension_numbers = #tpu.dot_dimension_numbers<[2], [2], [1], [1], [0, 0, 0, 1, 1, 1], [0], [0]>} : vector<2x8x16xf32>, vector<2x8x16xf32>, vector<2x8x8xf32> -> vector<2x8x8xf32>
    "tpu.trace_stop"() : () -> ()
    %cst_22 = arith.constant 2.500000e-01 : f32
    %64 = vector.broadcast %cst_22 : f32 to vector<2x8x8xf32>
    %65 = arith.mulf %63, %64 : vector<2x8x8xf32>
    %cst_23 = arith.constant dense<0xFF800000> : vector<2x8xf32>
    %66 = vector.multi_reduction <maximumf>, %65, %cst_23 [2] : vector<2x8x8xf32> to vector<2x8xf32>
    %67 = vector.shape_cast %66 : vector<2x8xf32> to vector<2x8x1xf32>
    %68 = vector.broadcast %67 : vector<2x8x1xf32> to vector<2x8x8xf32>
    %69 = arith.subf %65, %68 : vector<2x8x8xf32>
    %70 = math.exp %69 : vector<2x8x8xf32>
    %cst_24 = arith.constant dense<0.000000e+00> : vector<2x8xf32>
    %71 = vector.multi_reduction <add>, %70, %cst_24 [2] : vector<2x8x8xf32> to vector<2x8xf32>
    %72 = vector.shape_cast %71 : vector<2x8xf32> to vector<2x8x1xf32>
    %73 = tpu.reciprocal %72 {approx = true} : vector<2x8x1xf32> -> vector<2x8x1xf32>
    %74 = vector.broadcast %73 : vector<2x8x1xf32> to vector<2x8x8xf32>
    %75 = arith.mulf %70, %74 : vector<2x8x8xf32>
    "tpu.trace_start"() <{level = 10 : i32, message = "bqk,bkd->bqd"}> : () -> ()
    %cst_25 = arith.constant dense<0.000000e+00> : vector<2x8x16xf32>
    %76 = tpu.matmul %75, %62, %cst_25 {dimension_numbers = #tpu.dot_dimension_numbers<[2], [1], [1], [2], [0, 0, 0, 1, 1, 2], [0], [0]>} : vector<2x8x8xf32>, vector<2x8x16xf32>, vector<2x8x16xf32> -> vector<2x8x16xf32>
    "tpu.trace_stop"() : () -> ()
    %77 = vector.shape_cast %76 : vector<2x8x16xf32> to vector<16x16xf32>
    %c0_26 = arith.constant 0 : index
    %c16 = arith.constant 16 : index
    %78 = vector.load %arg8[%c0_26, %c16] : memref<16x32xf32, #tpu.memory_space<vmem>>, vector<16x16xf32>
    tpu.vector_store %arg8[%c0_26, %c16], %77 {strides = array<i32>} : memref<16x32xf32, #tpu.memory_space<vmem>>, vector<16x16xf32>,
    %c0_27 = arith.constant 0 : index
    %c0_28 = arith.constant 0 : index
    %79 = vector.load %arg8[%c0_27, %c0_28] : memref<16x32xf32, #tpu.memory_space<vmem>>, vector<16x32xf32>
    %c0_29 = arith.constant 0 : index
    %c0_30 = arith.constant 0 : index
    %80 = vector.load %arg5[%c0_29, %c0_30] : memref<32x32xf32, #tpu.memory_space<vmem>>, vector<32x32xf32>
    %cst_31 = arith.constant dense<0.000000e+00> : vector<16x32xf32>
    %81 = tpu.matmul %79, %80, %cst_31 {dimension_numbers = #tpu.dot_dimension_numbers<[1], [0], [0], [1], [0, 0, 1, 1], [], []>} : vector<16x32xf32>, vector<32x32xf32>, vector<16x32xf32> -> vector<16x32xf32>
    %c0_32 = arith.constant 0 : index
    %c0_33 = arith.constant 0 : index
    %82 = vector.load %arg6[%c0_32, %c0_33] : memref<1x32xf32, #tpu.memory_space<vmem>>, vector<1x32xf32>
    %83 = vector.broadcast %82 : vector<1x32xf32> to vector<16x32xf32>
    %84 = arith.addf %81, %83 : vector<16x32xf32>
    %85 = arith.addf %84, %0 : vector<16x32xf32>
    %c0_34 = arith.constant 0 : index
    %c0_35 = arith.constant 0 : index
    %86 = vector.load %arg7[%c0_34, %c0_35] : memref<16x32xf32, #tpu.memory_space<vmem>>, vector<16x32xf32>
    tpu.vector_store %arg7[%c0_34, %c0_35], %85 {strides = array<i32>} : memref<16x32xf32, #tpu.memory_space<vmem>>, vector<16x32xf32>,
    return
  }
}

</mosaic_0001>

<llo_original>
// kernel: tpu_custom_call.1
$region0: #{tpu_custom_call.1}
  #allocation0 [shape = 'u32[]', space=smem, size = 0x4, offset = 0x4, fixed_abs, tag = 'smem constant byte address 0x4 - core index']
  #allocation1 [shape = 'u32[144,128]{1,0:T(1,128)}', space=vmem, size = 0x12000, scoped, tag = 'internal scratch']
  #allocation2 [shape = 'f32[16,32]{1,0:T(8,128)}', space=vmem, size = 0x2000, scoped, tag = 'scratch operand']
  %s0 = inlined_call_operand.hbm [shape: f32[16,32], index: 0, kind: input, shape index: {}]
  %s1 = inlined_call_operand.vmem [shape: f32[1,32], index: 1, kind: input, shape index: {}]
  %s2 = inlined_call_operand.vmem [shape: f32[1,32], index: 2, kind: input, shape index: {}]
  %s3 = inlined_call_operand.hbm [shape: f32[32,96], index: 3, kind: input, shape index: {}]
  %s4 = inlined_call_operand.vmem [shape: f32[1,96], index: 4, kind: input, shape index: {}]
  %s5 = inlined_call_operand.hbm [shape: f32[32,32], index: 5, kind: input, shape index: {}]
  %s6 = inlined_call_operand.vmem [shape: f32[1,32], index: 6, kind: input, shape index: {}]
  %s7 = inlined_call_operand.hbm [shape: f32[16,32], index: 7, kind: output, shape index: {}]
  %s8 = sld [smem:[#allocation0]]
  $region50: #{tpu_custom_call.1} parent=0
    _
  %s10 = ssub.s32 1, %s8
  %s11 = scalar_select 0, %s10, %s8
  $region1: #{tpu_custom_call.1} parent=0
    #allocation3 [shape = 'u8[8192]{0}', space=vmem, size = 0x2000, scoped, tag = 'input window, operand 0, single buffered']
    #allocation4 [shape = 's32[1]{0}', space=sflag, size = 0x4, scoped, tag = 'scoped memory for tpu_custom_call.1']
    #allocation5 [shape = 's32[1]{0}', space=sflag, size = 0x4, scoped, tag = 'scoped memory for tpu_custom_call.1']
    #allocation6 [shape = 'u8[16384]{0}', space=vmem, size = 0x4000, scoped, tag = 'input window, operand 3, single buffered']
    #allocation7 [shape = 's32[1]{0}', space=sflag, size = 0x4, scoped, tag = 'scoped memory for tpu_custom_call.1']
    #allocation8 [shape = 'u8[16384]{0}', space=vmem, size = 0x4000, scoped, tag = 'input window, operand 5, single buffered']
    #allocation9 [shape = 'u8[8192]{0}', space=vmem, size = 0x2000, scoped, tag = 'output window, operand 0, single buffered']
    %12 = vsyncpa [#allocation4], 0
    %13 = vsyncpa [#allocation7], 0
    %14 = vsyncpa [#allocation5], 0
    // Predicated region
    $region2: #{tpu_custom_call.1} parent=1 // pred_check
      _
    $region3: #{tpu_custom_call.1} parent=1 // pred_check_branch
      %16 = sbr.rel (0) target = $region5
    $region4: #{tpu_custom_call.1} parent=1 // pred_region
      %s18 = ssub.s32 256, 256
      %19 = vsyncadd [#allocation4], %s18
      %s20 = sshll.u32 [#allocation3], 4
      %s21 = int_to_ptr.vmem [resolvable:$true] %s20
      %26 = dma.hbm_to_vmem [thread:$0]  %s0, 256, %s21, [#allocation4], 128, 128, 8
    $region5: #{tpu_custom_call.1} parent=1 // pred_fallthru
      _
    // Predicated region
    $region6: #{tpu_custom_call.1} parent=1 // pred_check
      _
    $region7: #{tpu_custom_call.1} parent=1 // pred_check_branch
      %28 = sbr.rel (0) target = $region9
    $region8: #{tpu_custom_call.1} parent=1 // pred_region
      _
    $region9: #{tpu_custom_call.1} parent=1 // pred_fallthru
      _
    // Predicated region
    $region10: #{tpu_custom_call.1} parent=1 // pred_check
      _
    $region11: #{tpu_custom_call.1} parent=1 // pred_check_branch
      %30 = sbr.rel (0) target = $region13
    $region12: #{tpu_custom_call.1} parent=1 // pred_region
      _
    $region13: #{tpu_custom_call.1} parent=1 // pred_fallthru
      _
    // Predicated region
    $region14: #{tpu_custom_call.1} parent=1 // pred_check
      _
    $region15: #{tpu_custom_call.1} parent=1 // pred_check_branch
      %32 = sbr.rel (0) target = $region17
    $region16: #{tpu_custom_call.1} parent=1 // pred_region
      %s34 = ssub.s32 512, 512
      %35 = vsyncadd [#allocation7], %s34
      %s36 = sshll.u32 [#allocation6], 4
      %s37 = int_to_ptr.vmem [resolvable:$true] %s36
      %42 = dma.hbm_to_vmem [thread:$0]  %s3, 512, %s37, [#allocation7], 128, 128, 8
    $region17: #{tpu_custom_call.1} parent=1 // pred_fallthru
      _
    // Predicated region
    $region18: #{tpu_custom_call.1} parent=1 // pred_check
      _
    $region19: #{tpu_custom_call.1} parent=1 // pred_check_branch
      %44 = sbr.rel (0) target = $region21
    $region20: #{tpu_custom_call.1} parent=1 // pred_region
      _
    $region21: #{tpu_custom_call.1} parent=1 // pred_fallthru
      _
    // Predicated region
    $region22: #{tpu_custom_call.1} parent=1 // pred_check
      _
    $region23: #{tpu_custom_call.1} parent=1 // pred_check_branch
      %46 = sbr.rel (0) target = $region25
    $region24: #{tpu_custom_call.1} parent=1 // pred_region
      %s48 = ssub.s32 512, 512
      %49 = vsyncadd [#allocation7], %s48
      %s50 = sshll.u32 [#allocation8], 4
      %s51 = int_to_ptr.vmem [resolvable:$true] %s50
      %56 = dma.hbm_to_vmem [thread:$0]  %s5, 512, %s51, [#allocation7], 128, 128, 8
    $region25: #{tpu_custom_call.1} parent=1 // pred_fallthru
      _
    // Predicated region
    $region26: #{tpu_custom_call.1} parent=1 // pred_check
      _
    $region27: #{tpu_custom_call.1} parent=1 // pred_check_branch
      %58 = sbr.rel (0) target = $region29
    $region28: #{tpu_custom_call.1} parent=1 // pred_region
      _
    $region29: #{tpu_custom_call.1} parent=1 // pred_fallthru
      _
    // Predicated region
    $region30: #{tpu_custom_call.1} parent=1 // pred_check
      _
    $region31: #{tpu_custom_call.1} parent=1 // pred_check_branch
      %60 = sbr.rel (0) target = $region33
    $region32: #{tpu_custom_call.1} parent=1 // pred_region
      %61 = dma.done [#allocation4], 256
    $region33: #{tpu_custom_call.1} parent=1 // pred_fallthru
      _
    // Predicated region
    $region34: #{tpu_custom_call.1} parent=1 // pred_check
      _
    $region35: #{tpu_custom_call.1} parent=1 // pred_check_branch
      %63 = sbr.rel (0) target = $region37
    $region36: #{tpu_custom_call.1} parent=1 // pred_region
      %64 = dma.done [#allocation7], 512
    $region37: #{tpu_custom_call.1} parent=1 // pred_fallthru
      _
    // Predicated region
    $region38: #{tpu_custom_call.1} parent=1 // pred_check
      _
    $region39: #{tpu_custom_call.1} parent=1 // pred_check_branch
      %66 = sbr.rel (0) target = $region41
    $region40: #{tpu_custom_call.1} parent=1 // pred_region
      %67 = dma.done [#allocation7], 512
    $region41: #{tpu_custom_call.1} parent=1 // pred_fallthru
      _
    %v68 = vld [vmem:[#allocation3] sm:$0xff]
    %v69 = vld [vmem:[#allocation3 + $0x8] sm:$0xff]
    %vm70 = vcmask 261120
    %v71 = vsel %vm70, %v68, 0.0
    %72 = vadd.xlane.f32.xlu0 %v71
    %v73 = vpop.xlane.xlu0 %72
    %v74 = vsel %vm70, %v69, 0.0
    %75 = vadd.xlane.f32.xlu0 %v74
    %v76 = vpop.xlane.xlu0 %75
    %v77 = vrcp.pop 32.0
    %v78 = vmul.f32 %v73, %v77
    %v79 = vmul.f32 %v76, %v77
    %v80 = vsub.f32 %v68, %v78
    %v81 = vsub.f32 %v69, %v79
    %v82 = vmul.f32 %v80, %v80
    %v83 = vmul.f32 %v81, %v81
    %v84 = vsel %vm70, %v82, 0.0
    %85 = vadd.xlane.f32.xlu0 %v84
    %v86 = vpop.xlane.xlu0 %85
    %v87 = vsel %vm70, %v83, 0.0
    %88 = vadd.xlane.f32.xlu0 %v87
    %v89 = vpop.xlane.xlu0 %88
    %v90 = vmul.f32 %v86, %v77
    %v91 = vmul.f32 %v89, %v77
    %v92 = vadd.f32 %v90, 1e-05
    %v93 = vadd.f32 %v91, 1e-05
    %v94 = vrsqrt.pop %v92
    %v95 = vrsqrt.pop %v93
    %v96 = vmul.f32 %v80, %v94
    %v97 = vmul.f32 %v81, %v95
    %v98 = vld [vmem:[%s1] sm:$0x1]
    %v100 = vlaneseq
    %v101 = vshrl.u32 %v100, 7
    %v102 = vsub.s32 0, %v101
    %v103 = vrot.slane %v98, %v102
    %v105 = vmul.f32 %v96, %v103
    %v106 = vmul.f32 %v97, %v103
    %v107 = vld [vmem:[%s2] sm:$0x1]
    %v109 = vlaneseq
    %v110 = vshrl.u32 %v109, 7
    %v111 = vsub.s32 0, %v110
    %v112 = vrot.slane %v107, %v111
    %v114 = vadd.f32 %v105, %v112
    %v115 = vadd.f32 %v106, %v112
    %v116 = vld [vmem:[#allocation6] sm:$0xff]
    %v117 = vld [vmem:[#allocation6 + $0x8] sm:$0xff]
    %v118 = vld [vmem:[#allocation6 + $0x10] sm:$0xff]
    %v119 = vld [vmem:[#allocation6 + $0x18] sm:$0xff]
    %v120 = vld [vmem:[%s4] sm:$0x1]
    %v122 = vlaneseq
    %v123 = vshrl.u32 %v122, 7
    %v124 = vsub.s32 0, %v123
    %v125 = vrot.slane %v120, %v124
    %v128 = vsel %vm70, %v114, 0
    %v131 = vsel %vm70, %v115, 0
    %133 = vmatprep.subr.mxu0 0.0
    %134 = vmatpush1.msra.mxu0 %v116
    %135 = vmatprep.subr.mxu0 0.0
    %136 = vmatpush1.msra.mxu0 %v117
    %137 = vmatprep.subr.mxu0 0.0
    %138 = vmatpush1.msra.mxu0 %v118
    %139 = vmatprep.subr.mxu0 0.0
    %140 = vmatpush1.msra.mxu0 %v119
    %141 = vmatprep.subr.mxu0 0.0
    %142 = vmatpush1.msra.mxu0 0.0
    %143 = vmatprep.subr.mxu0 0.0
    %144 = vmatpush1.msra.mxu0 0.0
    %145 = vmatprep.subr.mxu0 0.0
    %146 = vmatpush1.msra.mxu0 0.0
    %147 = vmatprep.subr.mxu0 0.0
    %148 = vmatpush1.msra.mxu0 0.0
    %149 = vmatprep.subr.mxu0 0.0
    %150 = vmatpush1.msra.mxu0 0.0
    %151 = vmatprep.subr.mxu0 0.0
    %152 = vmatpush1.msra.mxu0 0.0
    %153 = vmatprep.subr.mxu0 0.0
    %154 = vmatpush1.msra.mxu0 0.0
    %155 = vmatprep.subr.mxu0 0.0
    %156 = vmatpush1.msra.mxu0 0.0
    %157 = vmatprep.subr.mxu0 0.0
    %158 = vmatpush1.msra.mxu0 0.0
    %159 = vmatprep.subr.mxu0 0.0
    %160 = vmatpush1.msra.mxu0 0.0
    %161 = vmatprep.subr.mxu0 0.0
    %162 = vmatpush1.msra.mxu0 0.0
    %163 = vmatprep.subr.mxu0 0.0
    %164 = vmatpush1.msra.mxu0 0.0
    %165 = vmatprep.subr.mxu0 0.0
    %166 = vmatpush1.msra.mxu0 0.0
    %167 = vmatprep.subr.mxu0 0.0
    %168 = vmatpush1.msra.mxu0 0.0
    %169 = vmatprep.subr.mxu0 0.0
    %170 = vmatpush1.msra.mxu0 0.0
    %171 = vmatprep.subr.mxu0 0.0
    %172 = vmatpush1.msra.mxu0 0.0
    %173 = vmatprep.subr.mxu0 0.0
    %174 = vmatpush1.msra.mxu0 0.0
    %175 = vmatprep.subr.mxu0 0.0
    %176 = vmatpush1.msra.mxu0 0.0
    %177 = vmatprep.subr.mxu0 0.0
    %178 = vmatpush1.msra.mxu0 0.0
    %179 = vmatprep.subr.mxu0 0.0
    %180 = vmatpush1.msra.mxu0 0.0
    %181 = vmatprep.subr.mxu0 0.0
    %182 = vmatpush1.msra.mxu0 0.0
    %183 = vmatprep.subr.mxu0 0.0
    %184 = vmatpush1.msra.mxu0 0.0
    %185 = vmatprep.subr.mxu0 0.0
    %186 = vmatpush1.msra.mxu0 0.0
    %187 = vmatprep.subr.mxu0 0.0
    %188 = vmatpush1.msra.mxu0 0.0
    %189 = vmatprep.subr.mxu0 0.0
    %190 = vmatpush1.msra.mxu0 0.0
    %191 = vmatprep.subr.mxu0 0.0
    %192 = vmatpush1.msra.mxu0 0.0
    %193 = vmatprep.subr.mxu0 0.0
    %194 = vmatpush1.msra.mxu0 0.0
    %195 = vmatprep.subr.mxu0 0.0
    %196 = vmatpush1.msra.mxu0 0.0
    %197 = vmatprep.mubr.f32.mxu0 0.0
    %198 = vmatmul.mubr.f32.gmra.mrb[0].mxu0 %v128
    %v199 = vpop.f32.mrb[0].mxu0
    %v200 = vadd.f32 %v125, %v199
    %v201 = vpop.f32.mrb[0].mxu0
    %202 = vmatprep.mubr.f32.mxu0 0.0
    %203 = vmatmul.mubr.f32.gmra.mrb[0].mxu0 %v131
    %v204 = vpop.f32.mrb[0].mxu0
    %v205 = vadd.f32 %v125, %v204
    %v206 = vpop.f32.mrb[0].mxu0
    %207 = vdwg.mxu0
    %209 = vrot.lane.b32.xlu0 %v200, 96
    %v210 = vpop.permute.xlu0 %209
    %vm211 = vcmask 130048
    %v212 = vsel %vm211, %v200, 0
    %v214 = vsel %vm211, %v210, 0
    %216 = vmatprep.subr.mxu0 0.0
    %217 = vmatpush1.xpose.msra.mxu0 %v214
    %218 = vmatprep.subr.mxu0 0.0
    %219 = vmatpush1.xpose.msra.mxu0 0.0
    %220 = vmatprep.subr.mxu0 0.0
    %221 = vmatpush1.xpose.msra.mxu0 0.0
    %222 = vmatprep.subr.mxu0 0.0
    %223 = vmatpush1.xpose.msra.mxu0 0.0
    %224 = vmatprep.subr.mxu0 0.0
    %225 = vmatpush1.xpose.msra.mxu0 0.0
    %226 = vmatprep.subr.mxu0 0.0
    %227 = vmatpush1.xpose.msra.mxu0 0.0
    %228 = vmatprep.subr.mxu0 0.0
    %229 = vmatpush1.xpose.msra.mxu0 0.0
    %230 = vmatprep.subr.mxu0 0.0
    %231 = vmatpush1.xpose.msra.mxu0 0.0
    %232 = vmatprep.subr.mxu0 0.0
    %233 = vmatpush1.xpose.msra.mxu0 0.0
    %234 = vmatprep.subr.mxu0 0.0
    %235 = vmatpush1.xpose.msra.mxu0 0.0
    %236 = vmatprep.subr.mxu0 0.0
    %237 = vmatpush1.xpose.msra.mxu0 0.0
    %238 = vmatprep.subr.mxu0 0.0
    %239 = vmatpush1.xpose.msra.mxu0 0.0
    %240 = vmatprep.subr.mxu0 0.0
    %241 = vmatpush1.xpose.msra.mxu0 0.0
    %242 = vmatprep.subr.mxu0 0.0
    %243 = vmatpush1.xpose.msra.mxu0 0.0
    %244 = vmatprep.subr.mxu0 0.0
    %245 = vmatpush1.xpose.msra.mxu0 0.0
    %246 = vmatprep.subr.mxu0 0.0
    %247 = vmatpush1.xpose.msra.mxu0 0.0
    %248 = vmatprep.subr.mxu0 0.0
    %249 = vmatpush1.xpose.msra.mxu0 0.0
    %250 = vmatprep.subr.mxu0 0.0
    %251 = vmatpush1.xpose.msra.mxu0 0.0
    %252 = vmatprep.subr.mxu0 0.0
    %253 = vmatpush1.xpose.msra.mxu0 0.0
    %254 = vmatprep.subr.mxu0 0.0
    %255 = vmatpush1.xpose.msra.mxu0 0.0
    %256 = vmatprep.subr.mxu0 0.0
    %257 = vmatpush1.xpose.msra.mxu0 0.0
    %258 = vmatprep.subr.mxu0 0.0
    %259 = vmatpush1.xpose.msra.mxu0 0.0
    %260 = vmatprep.subr.mxu0 0.0
    %261 = vmatpush1.xpose.msra.mxu0 0.0
    %262 = vmatprep.subr.mxu0 0.0
    %263 = vmatpush1.xpose.msra.mxu0 0.0
    %264 = vmatprep.subr.mxu0 0.0
    %265 = vmatpush1.xpose.msra.mxu0 0.0
    %266 = vmatprep.subr.mxu0 0.0
    %267 = vmatpush1.xpose.msra.mxu0 0.0
    %268 = vmatprep.subr.mxu0 0.0
    %269 = vmatpush1.xpose.msra.mxu0 0.0
    %270 = vmatprep.subr.mxu0 0.0
    %271 = vmatpush1.xpose.msra.mxu0 0.0
    %272 = vmatprep.subr.mxu0 0.0
    %273 = vmatpush1.xpose.msra.mxu0 0.0
    %274 = vmatprep.subr.mxu0 0.0
    %275 = vmatpush1.xpose.msra.mxu0 0.0
    %276 = vmatprep.subr.mxu0 0.0
    %277 = vmatpush1.xpose.msra.mxu0 0.0
    %278 = vmatprep.subr.mxu0 0.0
    %279 = vmatpush1.xpose.msra.mxu0 0.0
    %280 = vmatprep.mubr.f32.mxu0 0.0
    %281 = vmatmul.mubr.f32.gmra.mrb[0].mxu0 %v212
    %v282 = vpop.f32.mrb[0].mxu0
    %v283 = vadd.f32 0.0, %v282
    %v284 = vpop.f32.mrb[0].mxu0
    %285 = vdwg.mxu0
    %287 = vrot.lane.b32.xlu0 %v205, 96
    %v288 = vpop.permute.xlu0 %287
    %v289 = vsel %vm211, %v205, 0
    %v291 = vsel %vm211, %v288, 0
    %293 = vmatprep.subr.mxu0 0.0
    %294 = vmatpush1.xpose.msra.mxu0 %v291
    %295 = vmatprep.subr.mxu0 0.0
    %296 = vmatpush1.xpose.msra.mxu0 0.0
    %297 = vmatprep.subr.mxu0 0.0
    %298 = vmatpush1.xpose.msra.mxu0 0.0
    %299 = vmatprep.subr.mxu0 0.0
    %300 = vmatpush1.xpose.msra.mxu0 0.0
    %301 = vmatprep.subr.mxu0 0.0
    %302 = vmatpush1.xpose.msra.mxu0 0.0
    %303 = vmatprep.subr.mxu0 0.0
    %304 = vmatpush1.xpose.msra.mxu0 0.0
    %305 = vmatprep.subr.mxu0 0.0
    %306 = vmatpush1.xpose.msra.mxu0 0.0
    %307 = vmatprep.subr.mxu0 0.0
    %308 = vmatpush1.xpose.msra.mxu0 0.0
    %309 = vmatprep.subr.mxu0 0.0
    %310 = vmatpush1.xpose.msra.mxu0 0.0
    %311 = vmatprep.subr.mxu0 0.0
    %312 = vmatpush1.xpose.msra.mxu0 0.0
    %313 = vmatprep.subr.mxu0 0.0
    %314 = vmatpush1.xpose.msra.mxu0 0.0
    %315 = vmatprep.subr.mxu0 0.0
    %316 = vmatpush1.xpose.msra.mxu0 0.0
    %317 = vmatprep.subr.mxu0 0.0
    %318 = vmatpush1.xpose.msra.mxu0 0.0
    %319 = vmatprep.subr.mxu0 0.0
    %320 = vmatpush1.xpose.msra.mxu0 0.0
    %321 = vmatprep.subr.mxu0 0.0
    %322 = vmatpush1.xpose.msra.mxu0 0.0
    %323 = vmatprep.subr.mxu0 0.0
    %324 = vmatpush1.xpose.msra.mxu0 0.0
    %325 = vmatprep.subr.mxu0 0.0
    %326 = vmatpush1.xpose.msra.mxu0 0.0
    %327 = vmatprep.subr.mxu0 0.0
    %328 = vmatpush1.xpose.msra.mxu0 0.0
    %329 = vmatprep.subr.mxu0 0.0
    %330 = vmatpush1.xpose.msra.mxu0 0.0
    %331 = vmatprep.subr.mxu0 0.0
    %332 = vmatpush1.xpose.msra.mxu0 0.0
    %333 = vmatprep.subr.mxu0 0.0
    %334 = vmatpush1.xpose.msra.mxu0 0.0
    %335 = vmatprep.subr.mxu0 0.0
    %336 = vmatpush1.xpose.msra.mxu0 0.0
    %337 = vmatprep.subr.mxu0 0.0
    %338 = vmatpush1.xpose.msra.mxu0 0.0
    %339 = vmatprep.subr.mxu0 0.0
    %340 = vmatpush1.xpose.msra.mxu0 0.0
    %341 = vmatprep.subr.mxu0 0.0
    %342 = vmatpush1.xpose.msra.mxu0 0.0
    %343 = vmatprep.subr.mxu0 0.0
    %344 = vmatpush1.xpose.msra.mxu0 0.0
    %345 = vmatprep.subr.mxu0 0.0
    %346 = vmatpush1.xpose.msra.mxu0 0.0
    %347 = vmatprep.subr.mxu0 0.0
    %348 = vmatpush1.xpose.msra.mxu0 0.0
    %349 = vmatprep.subr.mxu0 0.0
    %350 = vmatpush1.xpose.msra.mxu0 0.0
    %351 = vmatprep.subr.mxu0 0.0
    %352 = vmatpush1.xpose.msra.mxu0 0.0
    %353 = vmatprep.subr.mxu0 0.0
    %354 = vmatpush1.xpose.msra.mxu0 0.0
    %355 = vmatprep.subr.mxu0 0.0
    %356 = vmatpush1.xpose.msra.mxu0 0.0
    %357 = vmatprep.mubr.f32.mxu0 0.0
    %358 = vmatmul.mubr.f32.gmra.mrb[0].mxu0 %v289
    %v359 = vpop.f32.mrb[0].mxu0
    %v360 = vadd.f32 0.0, %v359
    %v361 = vpop.f32.mrb[0].mxu0
    %362 = vdwg.mxu0
    %v363 = vmul.f32 %v283, 0.25
    %v364 = vmul.f32 %v360, 0.25
    %vm365 = vcmask 64512
    %v366 = vsel %vm365, %v363, -inf
    %367 = vmax.xlane.f32.xlu0 %v366
    %v368 = vpop.xlane.xlu0 %367
    %v369 = vsel %vm365, %v364, -inf
    %370 = vmax.xlane.f32.xlu0 %v369
    %v371 = vpop.xlane.xlu0 %370
    %v372 = vsub.f32 %v363, %v368
    %v373 = vsub.f32 %v364, %v371
    %v374 = vmul.f32 %v372, 1.442695
    %v375 = vpow.pop %v374
    %v376 = vmul.f32 %v373, 1.442695
    %v377 = vpow.pop %v376
    %v378 = vsel %vm365, %v375, 0.0
    %379 = vadd.xlane.f32.xlu0 %v378
    %v380 = vpop.xlane.xlu0 %379
    %v381 = vsel %vm365, %v377, 0.0
    %382 = vadd.xlane.f32.xlu0 %v381
    %v383 = vpop.xlane.xlu0 %382
    %v384 = vrcp.pop %v380
    %v385 = vrcp.pop %v383
    %v386 = vmul.f32 %v375, %v384
    %v387 = vmul.f32 %v377, %v385
    %388 = vrot.lane.b32.xlu0 %v200, 64
    %v389 = vpop.permute.xlu0 %388
    %v392 = vsel %vm365, %v386, 0
    %394 = vmatprep.subr.mxu0 0.0
    %395 = vmatpush1.msra.mxu0 %v389
    %396 = vmatprep.subr.mxu0 0.0
    %397 = vmatpush1.msra.mxu0 0.0
    %398 = vmatprep.subr.mxu0 0.0
    %399 = vmatpush1.msra.mxu0 0.0
    %400 = vmatprep.subr.mxu0 0.0
    %401 = vmatpush1.msra.mxu0 0.0
    %402 = vmatprep.subr.mxu0 0.0
    %403 = vmatpush1.msra.mxu0 0.0
    %404 = vmatprep.subr.mxu0 0.0
    %405 = vmatpush1.msra.mxu0 0.0
    %406 = vmatprep.subr.mxu0 0.0
    %407 = vmatpush1.msra.mxu0 0.0
    %408 = vmatprep.subr.mxu0 0.0
    %409 = vmatpush1.msra.mxu0 0.0
    %410 = vmatprep.subr.mxu0 0.0
    %411 = vmatpush1.msra.mxu0 0.0
    %412 = vmatprep.subr.mxu0 0.0
    %413 = vmatpush1.msra.mxu0 0.0
    %414 = vmatprep.subr.mxu0 0.0
    %415 = vmatpush1.msra.mxu0 0.0
    %416 = vmatprep.subr.mxu0 0.0
    %417 = vmatpush1.msra.mxu0 0.0
    %418 = vmatprep.subr.mxu0 0.0
    %419 = vmatpush1.msra.mxu0 0.0
    %420 = vmatprep.subr.mxu0 0.0
    %421 = vmatpush1.msra.mxu0 0.0
    %422 = vmatprep.subr.mxu0 0.0
    %423 = vmatpush1.msra.mxu0 0.0
    %424 = vmatprep.subr.mxu0 0.0
    %425 = vmatpush1.msra.mxu0 0.0
    %426 = vmatprep.subr.mxu0 0.0
    %427 = vmatpush1.msra.mxu0 0.0
    %428 = vmatprep.subr.mxu0 0.0
    %429 = vmatpush1.msra.mxu0 0.0
    %430 = vmatprep.subr.mxu0 0.0
    %431 = vmatpush1.msra.mxu0 0.0
    %432 = vmatprep.subr.mxu0 0.0
    %433 = vmatpush1.msra.mxu0 0.0
    %434 = vmatprep.subr.mxu0 0.0
    %435 = vmatpush1.msra.mxu0 0.0
    %436 = vmatprep.subr.mxu0 0.0
    %437 = vmatpush1.msra.mxu0 0.0
    %438 = vmatprep.subr.mxu0 0.0
    %439 = vmatpush1.msra.mxu0 0.0
    %440 = vmatprep.subr.mxu0 0.0
    %441 = vmatpush1.msra.mxu0 0.0
    %442 = vmatprep.subr.mxu0 0.0
    %443 = vmatpush1.msra.mxu0 0.0
    %444 = vmatprep.subr.mxu0 0.0
    %445 = vmatpush1.msra.mxu0 0.0
    %446 = vmatprep.subr.mxu0 0.0
    %447 = vmatpush1.msra.mxu0 0.0
    %448 = vmatprep.subr.mxu0 0.0
    %449 = vmatpush1.msra.mxu0 0.0
    %450 = vmatprep.subr.mxu0 0.0
    %451 = vmatpush1.msra.mxu0 0.0
    %452 = vmatprep.subr.mxu0 0.0
    %453 = vmatpush1.msra.mxu0 0.0
    %454 = vmatprep.subr.mxu0 0.0
    %455 = vmatpush1.msra.mxu0 0.0
    %456 = vmatprep.subr.mxu0 0.0
    %457 = vmatpush1.msra.mxu0 0.0
    %458 = vmatprep.mubr.f32.mxu0 0.0
    %459 = vmatmul.mubr.f32.gmra.mrb[0].mxu0 %v392
    %v460 = vpop.f32.mrb[0].mxu0
    %v461 = vadd.f32 0.0, %v460
    %v462 = vpop.f32.mrb[0].mxu0
    %463 = vdwg.mxu0
    %464 = vrot.lane.b32.xlu0 %v205, 64
    %v465 = vpop.permute.xlu0 %464
    %v468 = vsel %vm365, %v387, 0
    %470 = vmatprep.subr.mxu0 0.0
    %471 = vmatpush1.msra.mxu0 %v465
    %472 = vmatprep.subr.mxu0 0.0
    %473 = vmatpush1.msra.mxu0 0.0
    %474 = vmatprep.subr.mxu0 0.0
    %475 = vmatpush1.msra.mxu0 0.0
    %476 = vmatprep.subr.mxu0 0.0
    %477 = vmatpush1.msra.mxu0 0.0
    %478 = vmatprep.subr.mxu0 0.0
    %479 = vmatpush1.msra.mxu0 0.0
    %480 = vmatprep.subr.mxu0 0.0
    %481 = vmatpush1.msra.mxu0 0.0
    %482 = vmatprep.subr.mxu0 0.0
    %483 = vmatpush1.msra.mxu0 0.0
    %484 = vmatprep.subr.mxu0 0.0
    %485 = vmatpush1.msra.mxu0 0.0
    %486 = vmatprep.subr.mxu0 0.0
    %487 = vmatpush1.msra.mxu0 0.0
    %488 = vmatprep.subr.mxu0 0.0
    %489 = vmatpush1.msra.mxu0 0.0
    %490 = vmatprep.subr.mxu0 0.0
    %491 = vmatpush1.msra.mxu0 0.0
    %492 = vmatprep.subr.mxu0 0.0
    %493 = vmatpush1.msra.mxu0 0.0
    %494 = vmatprep.subr.mxu0 0.0
    %495 = vmatpush1.msra.mxu0 0.0
    %496 = vmatprep.subr.mxu0 0.0
    %497 = vmatpush1.msra.mxu0 0.0
    %498 = vmatprep.subr.mxu0 0.0
    %499 = vmatpush1.msra.mxu0 0.0
    %500 = vmatprep.subr.mxu0 0.0
    %501 = vmatpush1.msra.mxu0 0.0
    %502 = vmatprep.subr.mxu0 0.0
    %503 = vmatpush1.msra.mxu0 0.0
    %504 = vmatprep.subr.mxu0 0.0
    %505 = vmatpush1.msra.mxu0 0.0
    %506 = vmatprep.subr.mxu0 0.0
    %507 = vmatpush1.msra.mxu0 0.0
    %508 = vmatprep.subr.mxu0 0.0
    %509 = vmatpush1.msra.mxu0 0.0
    %510 = vmatprep.subr.mxu0 0.0
    %511 = vmatpush1.msra.mxu0 0.0
    %512 = vmatprep.subr.mxu0 0.0
    %513 = vmatpush1.msra.mxu0 0.0
    %514 = vmatprep.subr.mxu0 0.0
    %515 = vmatpush1.msra.mxu0 0.0
    %516 = vmatprep.subr.mxu0 0.0
    %517 = vmatpush1.msra.mxu0 0.0
    %518 = vmatprep.subr.mxu0 0.0
    %519 = vmatpush1.msra.mxu0 0.0
    %520 = vmatprep.subr.mxu0 0.0
    %521 = vmatpush1.msra.mxu0 0.0
    %522 = vmatprep.subr.mxu0 0.0
    %523 = vmatpush1.msra.mxu0 0.0
    %524 = vmatprep.subr.mxu0 0.0
    %525 = vmatpush1.msra.mxu0 0.0
    %526 = vmatprep.subr.mxu0 0.0
    %527 = vmatpush1.msra.mxu0 0.0
    %528 = vmatprep.subr.mxu0 0.0
    %529 = vmatpush1.msra.mxu0 0.0
    %530 = vmatprep.subr.mxu0 0.0
    %531 = vmatpush1.msra.mxu0 0.0
    %532 = vmatprep.subr.mxu0 0.0
    %533 = vmatpush1.msra.mxu0 0.0
    %534 = vmatprep.mubr.f32.mxu0 0.0
    %535 = vmatmul.mubr.f32.gmra.mrb[0].mxu0 %v468
    %v536 = vpop.f32.mrb[0].mxu0
    %v537 = vadd.f32 0.0, %v536
    %v538 = vpop.f32.mrb[0].mxu0
    %539 = vdwg.mxu0
    %540 = vst.msk [vmem:[#allocation2] sm:$0xff] %vm211, %v461
    %541 = vst.msk [vmem:[#allocation2 + $0x8] sm:$0xff] %vm211, %v537
    %542 = vrot.lane.b32.xlu0 %v200, 112
    %v543 = vpop.permute.xlu0 %542
    %544 = vrot.lane.b32.xlu0 %v200, 80
    %v545 = vpop.permute.xlu0 %544
    %v546 = vsel %vm211, %v543, 0
    %v548 = vsel %vm211, %v545, 0
    %550 = vmatprep.subr.mxu0 0.0
    %551 = vmatpush1.xpose.msra.mxu0 %v548
    %552 = vmatprep.subr.mxu0 0.0
    %553 = vmatpush1.xpose.msra.mxu0 0.0
    %554 = vmatprep.subr.mxu0 0.0
    %555 = vmatpush1.xpose.msra.mxu0 0.0
    %556 = vmatprep.subr.mxu0 0.0
    %557 = vmatpush1.xpose.msra.mxu0 0.0
    %558 = vmatprep.subr.mxu0 0.0
    %559 = vmatpush1.xpose.msra.mxu0 0.0
    %560 = vmatprep.subr.mxu0 0.0
    %561 = vmatpush1.xpose.msra.mxu0 0.0
    %562 = vmatprep.subr.mxu0 0.0
    %563 = vmatpush1.xpose.msra.mxu0 0.0
    %564 = vmatprep.subr.mxu0 0.0
    %565 = vmatpush1.xpose.msra.mxu0 0.0
    %566 = vmatprep.subr.mxu0 0.0
    %567 = vmatpush1.xpose.msra.mxu0 0.0
    %568 = vmatprep.subr.mxu0 0.0
    %569 = vmatpush1.xpose.msra.mxu0 0.0
    %570 = vmatprep.subr.mxu0 0.0
    %571 = vmatpush1.xpose.msra.mxu0 0.0
    %572 = vmatprep.subr.mxu0 0.0
    %573 = vmatpush1.xpose.msra.mxu0 0.0
    %574 = vmatprep.subr.mxu0 0.0
    %575 = vmatpush1.xpose.msra.mxu0 0.0
    %576 = vmatprep.subr.mxu0 0.0
    %577 = vmatpush1.xpose.msra.mxu0 0.0
    %578 = vmatprep.subr.mxu0 0.0
    %579 = vmatpush1.xpose.msra.mxu0 0.0
    %580 = vmatprep.subr.mxu0 0.0
    %581 = vmatpush1.xpose.msra.mxu0 0.0
    %582 = vmatprep.subr.mxu0 0.0
    %583 = vmatpush1.xpose.msra.mxu0 0.0
    %584 = vmatprep.subr.mxu0 0.0
    %585 = vmatpush1.xpose.msra.mxu0 0.0
    %586 = vmatprep.subr.mxu0 0.0
    %587 = vmatpush1.xpose.msra.mxu0 0.0
    %588 = vmatprep.subr.mxu0 0.0
    %589 = vmatpush1.xpose.msra.mxu0 0.0
    %590 = vmatprep.subr.mxu0 0.0
    %591 = vmatpush1.xpose.msra.mxu0 0.0
    %592 = vmatprep.subr.mxu0 0.0
    %593 = vmatpush1.xpose.msra.mxu0 0.0
    %594 = vmatprep.subr.mxu0 0.0
    %595 = vmatpush1.xpose.msra.mxu0 0.0
    %596 = vmatprep.subr.mxu0 0.0
    %597 = vmatpush1.xpose.msra.mxu0 0.0
    %598 = vmatprep.subr.mxu0 0.0
    %599 = vmatpush1.xpose.msra.mxu0 0.0
    %600 = vmatprep.subr.mxu0 0.0
    %601 = vmatpush1.xpose.msra.mxu0 0.0
    %602 = vmatprep.subr.mxu0 0.0
    %603 = vmatpush1.xpose.msra.mxu0 0.0
    %604 = vmatprep.subr.mxu0 0.0
    %605 = vmatpush1.xpose.msra.mxu0 0.0
    %606 = vmatprep.subr.mxu0 0.0
    %607 = vmatpush1.xpose.msra.mxu0 0.0
    %608 = vmatprep.subr.mxu0 0.0
    %609 = vmatpush1.xpose.msra.mxu0 0.0
    %610 = vmatprep.subr.mxu0 0.0
    %611 = vmatpush1.xpose.msra.mxu0 0.0
    %612 = vmatprep.subr.mxu0 0.0
    %613 = vmatpush1.xpose.msra.mxu0 0.0
    %614 = vmatprep.mubr.f32.mxu0 0.0
    %615 = vmatmul.mubr.f32.gmra.mrb[0].mxu0 %v546
    %v616 = vpop.f32.mrb[0].mxu0
    %v617 = vadd.f32 0.0, %v616
    %v618 = vpop.f32.mrb[0].mxu0
    %619 = vdwg.mxu0
    %620 = vrot.lane.b32.xlu0 %v205, 112
    %v621 = vpop.permute.xlu0 %620
    %622 = vrot.lane.b32.xlu0 %v205, 80
    %v623 = vpop.permute.xlu0 %622
    %v624 = vsel %vm211, %v621, 0
    %v626 = vsel %vm211, %v623, 0
    %628 = vmatprep.subr.mxu0 0.0
    %629 = vmatpush1.xpose.msra.mxu0 %v626
    %630 = vmatprep.subr.mxu0 0.0
    %631 = vmatpush1.xpose.msra.mxu0 0.0
    %632 = vmatprep.subr.mxu0 0.0
    %633 = vmatpush1.xpose.msra.mxu0 0.0
    %634 = vmatprep.subr.mxu0 0.0
    %635 = vmatpush1.xpose.msra.mxu0 0.0
    %636 = vmatprep.subr.mxu0 0.0
    %637 = vmatpush1.xpose.msra.mxu0 0.0
    %638 = vmatprep.subr.mxu0 0.0
    %639 = vmatpush1.xpose.msra.mxu0 0.0
    %640 = vmatprep.subr.mxu0 0.0
    %641 = vmatpush1.xpose.msra.mxu0 0.0
    %642 = vmatprep.subr.mxu0 0.0
    %643 = vmatpush1.xpose.msra.mxu0 0.0
    %644 = vmatprep.subr.mxu0 0.0
    %645 = vmatpush1.xpose.msra.mxu0 0.0
    %646 = vmatprep.subr.mxu0 0.0
    %647 = vmatpush1.xpose.msra.mxu0 0.0
    %648 = vmatprep.subr.mxu0 0.0
    %649 = vmatpush1.xpose.msra.mxu0 0.0
    %650 = vmatprep.subr.mxu0 0.0
    %651 = vmatpush1.xpose.msra.mxu0 0.0
    %652 = vmatprep.subr.mxu0 0.0
    %653 = vmatpush1.xpose.msra.mxu0 0.0
    %654 = vmatprep.subr.mxu0 0.0
    %655 = vmatpush1.xpose.msra.mxu0 0.0
    %656 = vmatprep.subr.mxu0 0.0
    %657 = vmatpush1.xpose.msra.mxu0 0.0
    %658 = vmatprep.subr.mxu0 0.0
    %659 = vmatpush1.xpose.msra.mxu0 0.0
    %660 = vmatprep.subr.mxu0 0.0
    %661 = vmatpush1.xpose.msra.mxu0 0.0
    %662 = vmatprep.subr.mxu0 0.0
    %663 = vmatpush1.xpose.msra.mxu0 0.0
    %664 = vmatprep.subr.mxu0 0.0
    %665 = vmatpush1.xpose.msra.mxu0 0.0
    %666 = vmatprep.subr.mxu0 0.0
    %667 = vmatpush1.xpose.msra.mxu0 0.0
    %668 = vmatprep.subr.mxu0 0.0
    %669 = vmatpush1.xpose.msra.mxu0 0.0
    %670 = vmatprep.subr.mxu0 0.0
    %671 = vmatpush1.xpose.msra.mxu0 0.0
    %672 = vmatprep.subr.mxu0 0.0
    %673 = vmatpush1.xpose.msra.mxu0 0.0
    %674 = vmatprep.subr.mxu0 0.0
    %675 = vmatpush1.xpose.msra.mxu0 0.0
    %676 = vmatprep.subr.mxu0 0.0
    %677 = vmatpush1.xpose.msra.mxu0 0.0
    %678 = vmatprep.subr.mxu0 0.0
    %679 = vmatpush1.xpose.msra.mxu0 0.0
    %680 = vmatprep.subr.mxu0 0.0
    %681 = vmatpush1.xpose.msra.mxu0 0.0
    %682 = vmatprep.subr.mxu0 0.0
    %683 = vmatpush1.xpose.msra.mxu0 0.0
    %684 = vmatprep.subr.mxu0 0.0
    %685 = vmatpush1.xpose.msra.mxu0 0.0
    %686 = vmatprep.subr.mxu0 0.0
    %687 = vmatpush1.xpose.msra.mxu0 0.0
    %688 = vmatprep.subr.mxu0 0.0
    %689 = vmatpush1.xpose.msra.mxu0 0.0
    %690 = vmatprep.subr.mxu0 0.0
    %691 = vmatpush1.xpose.msra.mxu0 0.0
    %692 = vmatprep.mubr.f32.mxu0 0.0
    %693 = vmatmul.mubr.f32.gmra.mrb[0].mxu0 %v624
    %v694 = vpop.f32.mrb[0].mxu0
    %v695 = vadd.f32 0.0, %v694
    %v696 = vpop.f32.mrb[0].mxu0
    %697 = vdwg.mxu0
    %v698 = vmul.f32 %v617, 0.25
    %v699 = vmul.f32 %v695, 0.25
    %v700 = vsel %vm365, %v698, -inf
    %701 = vmax.xlane.f32.xlu0 %v700
    %v702 = vpop.xlane.xlu0 %701
    %v703 = vsel %vm365, %v699, -inf
    %704 = vmax.xlane.f32.xlu0 %v703
    %v705 = vpop.xlane.xlu0 %704
    %v706 = vsub.f32 %v698, %v702
    %v707 = vsub.f32 %v699, %v705
    %v708 = vmul.f32 %v706, 1.442695
    %v709 = vpow.pop %v708
    %v710 = vmul.f32 %v707, 1.442695
    %v711 = vpow.pop %v710
    %v712 = vsel %vm365, %v709, 0.0
    %713 = vadd.xlane.f32.xlu0 %v712
    %v714 = vpop.xlane.xlu0 %713
    %v715 = vsel %vm365, %v711, 0.0
    %716 = vadd.xlane.f32.xlu0 %v715
    %v717 = vpop.xlane.xlu0 %716
    %v718 = vrcp.pop %v714
    %v719 = vrcp.pop %v717
    %v720 = vmul.f32 %v709, %v718
    %v721 = vmul.f32 %v711, %v719
    %722 = vrot.lane.b32.xlu0 %v200, 48
    %v723 = vpop.permute.xlu0 %722
    %v726 = vsel %vm365, %v720, 0
    %728 = vmatprep.subr.mxu0 0.0
    %729 = vmatpush1.msra.mxu0 %v723
    %730 = vmatprep.subr.mxu0 0.0
    %731 = vmatpush1.msra.mxu0 0.0
    %732 = vmatprep.subr.mxu0 0.0
    %733 = vmatpush1.msra.mxu0 0.0
    %734 = vmatprep.subr.mxu0 0.0
    %735 = vmatpush1.msra.mxu0 0.0
    %736 = vmatprep.subr.mxu0 0.0
    %737 = vmatpush1.msra.mxu0 0.0
    %738 = vmatprep.subr.mxu0 0.0
    %739 = vmatpush1.msra.mxu0 0.0
    %740 = vmatprep.subr.mxu0 0.0
    %741 = vmatpush1.msra.mxu0 0.0
    %742 = vmatprep.subr.mxu0 0.0
    %743 = vmatpush1.msra.mxu0 0.0
    %744 = vmatprep.subr.mxu0 0.0
    %745 = vmatpush1.msra.mxu0 0.0
    %746 = vmatprep.subr.mxu0 0.0
    %747 = vmatpush1.msra.mxu0 0.0
    %748 = vmatprep.subr.mxu0 0.0
    %749 = vmatpush1.msra.mxu0 0.0
    %750 = vmatprep.subr.mxu0 0.0
    %751 = vmatpush1.msra.mxu0 0.0
    %752 = vmatprep.subr.mxu0 0.0
    %753 = vmatpush1.msra.mxu0 0.0
    %754 = vmatprep.subr.mxu0 0.0
    %755 = vmatpush1.msra.mxu0 0.0
    %756 = vmatprep.subr.mxu0 0.0
    %757 = vmatpush1.msra.mxu0 0.0
    %758 = vmatprep.subr.mxu0 0.0
    %759 = vmatpush1.msra.mxu0 0.0
    %760 = vmatprep.subr.mxu0 0.0
    %761 = vmatpush1.msra.mxu0 0.0
    %762 = vmatprep.subr.mxu0 0.0
    %763 = vmatpush1.msra.mxu0 0.0
    %764 = vmatprep.subr.mxu0 0.0
    %765 = vmatpush1.msra.mxu0 0.0
    %766 = vmatprep.subr.mxu0 0.0
    %767 = vmatpush1.msra.mxu0 0.0
    %768 = vmatprep.subr.mxu0 0.0
    %769 = vmatpush1.msra.mxu0 0.0
    %770 = vmatprep.subr.mxu0 0.0
    %771 = vmatpush1.msra.mxu0 0.0
    %772 = vmatprep.subr.mxu0 0.0
    %773 = vmatpush1.msra.mxu0 0.0
    %774 = vmatprep.subr.mxu0 0.0
    %775 = vmatpush1.msra.mxu0 0.0
    %776 = vmatprep.subr.mxu0 0.0
    %777 = vmatpush1.msra.mxu0 0.0
    %778 = vmatprep.subr.mxu0 0.0
    %779 = vmatpush1.msra.mxu0 0.0
    %780 = vmatprep.subr.mxu0 0.0
    %781 = vmatpush1.msra.mxu0 0.0
    %782 = vmatprep.subr.mxu0 0.0
    %783 = vmatpush1.msra.mxu0 0.0
    %784 = vmatprep.subr.mxu0 0.0
    %785 = vmatpush1.msra.mxu0 0.0
    %786 = vmatprep.subr.mxu0 0.0
    %787 = vmatpush1.msra.mxu0 0.0
    %788 = vmatprep.subr.mxu0 0.0
    %789 = vmatpush1.msra.mxu0 0.0
    %790 = vmatprep.subr.mxu0 0.0
    %791 = vmatpush1.msra.mxu0 0.0
    %792 = vmatprep.mubr.f32.mxu0 0.0
    %793 = vmatmul.mubr.f32.gmra.mrb[0].mxu0 %v726
    %v794 = vpop.f32.mrb[0].mxu0
    %v795 = vadd.f32 0.0, %v794
    %v796 = vpop.f32.mrb[0].mxu0
    %797 = vdwg.mxu0
    %798 = vrot.lane.b32.xlu0 %v205, 48
    %v799 = vpop.permute.xlu0 %798
    %v802 = vsel %vm365, %v721, 0
    %804 = vmatprep.subr.mxu0 0.0
    %805 = vmatpush1.msra.mxu0 %v799
    %806 = vmatprep.subr.mxu0 0.0
    %807 = vmatpush1.msra.mxu0 0.0
    %808 = vmatprep.subr.mxu0 0.0
    %809 = vmatpush1.msra.mxu0 0.0
    %810 = vmatprep.subr.mxu0 0.0
    %811 = vmatpush1.msra.mxu0 0.0
    %812 = vmatprep.subr.mxu0 0.0
    %813 = vmatpush1.msra.mxu0 0.0
    %814 = vmatprep.subr.mxu0 0.0
    %815 = vmatpush1.msra.mxu0 0.0
    %816 = vmatprep.subr.mxu0 0.0
    %817 = vmatpush1.msra.mxu0 0.0
    %818 = vmatprep.subr.mxu0 0.0
    %819 = vmatpush1.msra.mxu0 0.0
    %820 = vmatprep.subr.mxu0 0.0
    %821 = vmatpush1.msra.mxu0 0.0
    %822 = vmatprep.subr.mxu0 0.0
    %823 = vmatpush1.msra.mxu0 0.0
    %824 = vmatprep.subr.mxu0 0.0
    %825 = vmatpush1.msra.mxu0 0.0
    %826 = vmatprep.subr.mxu0 0.0
    %827 = vmatpush1.msra.mxu0 0.0
    %828 = vmatprep.subr.mxu0 0.0
    %829 = vmatpush1.msra.mxu0 0.0
    %830 = vmatprep.subr.mxu0 0.0
    %831 = vmatpush1.msra.mxu0 0.0
    %832 = vmatprep.subr.mxu0 0.0
    %833 = vmatpush1.msra.mxu0 0.0
    %834 = vmatprep.subr.mxu0 0.0
    %835 = vmatpush1.msra.mxu0 0.0
    %836 = vmatprep.subr.mxu0 0.0
    %837 = vmatpush1.msra.mxu0 0.0
    %838 = vmatprep.subr.mxu0 0.0
    %839 = vmatpush1.msra.mxu0 0.0
    %840 = vmatprep.subr.mxu0 0.0
    %841 = vmatpush1.msra.mxu0 0.0
    %842 = vmatprep.subr.mxu0 0.0
    %843 = vmatpush1.msra.mxu0 0.0
    %844 = vmatprep.subr.mxu0 0.0
    %845 = vmatpush1.msra.mxu0 0.0
    %846 = vmatprep.subr.mxu0 0.0
    %847 = vmatpush1.msra.mxu0 0.0
    %848 = vmatprep.subr.mxu0 0.0
    %849 = vmatpush1.msra.mxu0 0.0
    %850 = vmatprep.subr.mxu0 0.0
    %851 = vmatpush1.msra.mxu0 0.0
    %852 = vmatprep.subr.mxu0 0.0
    %853 = vmatpush1.msra.mxu0 0.0
    %854 = vmatprep.subr.mxu0 0.0
    %855 = vmatpush1.msra.mxu0 0.0
    %856 = vmatprep.subr.mxu0 0.0
    %857 = vmatpush1.msra.mxu0 0.0
    %858 = vmatprep.subr.mxu0 0.0
    %859 = vmatpush1.msra.mxu0 0.0
    %860 = vmatprep.subr.mxu0 0.0
    %861 = vmatpush1.msra.mxu0 0.0
    %862 = vmatprep.subr.mxu0 0.0
    %863 = vmatpush1.msra.mxu0 0.0
    %864 = vmatprep.subr.mxu0 0.0
    %865 = vmatpush1.msra.mxu0 0.0
    %866 = vmatprep.subr.mxu0 0.0
    %867 = vmatpush1.msra.mxu0 0.0
    %868 = vmatprep.mubr.f32.mxu0 0.0
    %869 = vmatmul.mubr.f32.gmra.mrb[0].mxu0 %v802
    %v870 = vpop.f32.mrb[0].mxu0
    %v871 = vadd.f32 0.0, %v870
    %v872 = vpop.f32.mrb[0].mxu0
    %873 = vdwg.mxu0
    %876 = vrot.lane.b32.xlu0 %v795, 16
    %v877 = vpop.permute.xlu0 %876
    %878 = vrot.lane.b32.xlu0 %v871, 16
    %v879 = vpop.permute.xlu0 %878
    %vm882 = vcmask 261248
    %883 = vst.msk [vmem:[#allocation2] sm:$0xff] %vm882, %v877
    %884 = vst.msk [vmem:[#allocation2 + $0x8] sm:$0xff] %vm882, %v879
    %v885 = vld [vmem:[#allocation2] sm:$0xff]
    %v886 = vld [vmem:[#allocation2 + $0x8] sm:$0xff]
    %v887 = vld [vmem:[#allocation8] sm:$0xff]
    %v888 = vld [vmem:[#allocation8 + $0x8] sm:$0xff]
    %v889 = vld [vmem:[#allocation8 + $0x10] sm:$0xff]
    %v890 = vld [vmem:[#allocation8 + $0x18] sm:$0xff]
    %v891 = vld [vmem:[%s6] sm:$0x1]
    %v893 = vlaneseq
    %v894 = vshrl.u32 %v893, 7
    %v895 = vsub.s32 0, %v894
    %v896 = vrot.slane %v891, %v895
    %v899 = vsel %vm70, %v885, 0
    %v902 = vsel %vm70, %v886, 0
    %904 = vmatprep.subr.mxu0 0.0
    %905 = vmatpush1.msra.mxu0 %v887
    %906 = vmatprep.subr.mxu0 0.0
    %907 = vmatpush1.msra.mxu0 %v888
    %908 = vmatprep.subr.mxu0 0.0
    %909 = vmatpush1.msra.mxu0 %v889
    %910 = vmatprep.subr.mxu0 0.0
    %911 = vmatpush1.msra.mxu0 %v890
    %912 = vmatprep.subr.mxu0 0.0
    %913 = vmatpush1.msra.mxu0 0.0
    %914 = vmatprep.subr.mxu0 0.0
    %915 = vmatpush1.msra.mxu0 0.0
    %916 = vmatprep.subr.mxu0 0.0
    %917 = vmatpush1.msra.mxu0 0.0
    %918 = vmatprep.subr.mxu0 0.0
    %919 = vmatpush1.msra.mxu0 0.0
    %920 = vmatprep.subr.mxu0 0.0
    %921 = vmatpush1.msra.mxu0 0.0
    %922 = vmatprep.subr.mxu0 0.0
    %923 = vmatpush1.msra.mxu0 0.0
    %924 = vmatprep.subr.mxu0 0.0
    %925 = vmatpush1.msra.mxu0 0.0
    %926 = vmatprep.subr.mxu0 0.0
    %927 = vmatpush1.msra.mxu0 0.0
    %928 = vmatprep.subr.mxu0 0.0
    %929 = vmatpush1.msra.mxu0 0.0
    %930 = vmatprep.subr.mxu0 0.0
    %931 = vmatpush1.msra.mxu0 0.0
    %932 = vmatprep.subr.mxu0 0.0
    %933 = vmatpush1.msra.mxu0 0.0
    %934 = vmatprep.subr.mxu0 0.0
    %935 = vmatpush1.msra.mxu0 0.0
    %936 = vmatprep.subr.mxu0 0.0
    %937 = vmatpush1.msra.mxu0 0.0
    %938 = vmatprep.subr.mxu0 0.0
    %939 = vmatpush1.msra.mxu0 0.0
    %940 = vmatprep.subr.mxu0 0.0
    %941 = vmatpush1.msra.mxu0 0.0
    %942 = vmatprep.subr.mxu0 0.0
    %943 = vmatpush1.msra.mxu0 0.0
    %944 = vmatprep.subr.mxu0 0.0
    %945 = vmatpush1.msra.mxu0 0.0
    %946 = vmatprep.subr.mxu0 0.0
    %947 = vmatpush1.msra.mxu0 0.0
    %948 = vmatprep.subr.mxu0 0.0
    %949 = vmatpush1.msra.mxu0 0.0
    %950 = vmatprep.subr.mxu0 0.0
    %951 = vmatpush1.msra.mxu0 0.0
    %952 = vmatprep.subr.mxu0 0.0
    %953 = vmatpush1.msra.mxu0 0.0
    %954 = vmatprep.subr.mxu0 0.0
    %955 = vmatpush1.msra.mxu0 0.0
    %956 = vmatprep.subr.mxu0 0.0
    %957 = vmatpush1.msra.mxu0 0.0
    %958 = vmatprep.subr.mxu0 0.0
    %959 = vmatpush1.msra.mxu0 0.0
    %960 = vmatprep.subr.mxu0 0.0
    %961 = vmatpush1.msra.mxu0 0.0
    %962 = vmatprep.subr.mxu0 0.0
    %963 = vmatpush1.msra.mxu0 0.0
    %964 = vmatprep.subr.mxu0 0.0
    %965 = vmatpush1.msra.mxu0 0.0
    %966 = vmatprep.subr.mxu0 0.0
    %967 = vmatpush1.msra.mxu0 0.0
    %968 = vmatprep.mubr.f32.mxu0 0.0
    %969 = vmatmul.mubr.f32.gmra.mrb[0].mxu0 %v899
    %v970 = vpop.f32.mrb[0].mxu0
    %v971 = vadd.f32 %v896, %v970
    %v972 = vpop.f32.mrb[0].mxu0
    %973 = vmatprep.mubr.f32.mxu0 0.0
    %974 = vmatmul.mubr.f32.gmra.mrb[0].mxu0 %v902
    %v975 = vpop.f32.mrb[0].mxu0
    %v976 = vadd.f32 %v896, %v975
    %v977 = vpop.f32.mrb[0].mxu0
    %978 = vdwg.mxu0
    %v979 = vadd.f32 %v971, %v68
    %v980 = vadd.f32 %v976, %v69
    %981 = vst.msk [vmem:[#allocation9] sm:$0xff] %vm70, %v979
    %982 = vst.msk [vmem:[#allocation9 + $0x8] sm:$0xff] %vm70, %v980
    // Predicated region
    $region42: #{tpu_custom_call.1} parent=1 // pred_check
      _
    $region43: #{tpu_custom_call.1} parent=1 // pred_check_branch
      %984 = sbr.rel (0) target = $region45
    $region44: #{tpu_custom_call.1} parent=1 // pred_region
      %s986 = ssub.s32 256, 256
      %987 = vsyncadd [#allocation5], %s986
      %s988 = sshll.u32 [#allocation9], 4
      %s989 = int_to_ptr.vmem [resolvable:$true] %s988
      %994 = dma.vmem_to_hbm [thread:$0]  %s989, 256, %s7, [#allocation5], 128, 128, 8
    $region45: #{tpu_custom_call.1} parent=1 // pred_fallthru
      _
    // Predicated region
    $region46: #{tpu_custom_call.1} parent=1 // pred_check
      _
    $region47: #{tpu_custom_call.1} parent=1 // pred_check_branch
      %996 = sbr.rel (0) target = $region49
    $region48: #{tpu_custom_call.1} parent=1 // pred_region
      %997 = dma.done [#allocation5], 256
    $region49: #{tpu_custom_call.1} parent=1 // pred_fallthru
      _
    %998 = vsyncpa [#allocation4], 1
    %999 = vsyncpa [#allocation7], 1
    %1000 = vsyncpa [#allocation5], 1

</llo_original>
